<compile_context>
chip_gen: v6e
topology: v6e:2x2x1
jax: 0.10.0
libtpu: 0.0.40
codegen_flags: <defaults>
</compile_context>

<pallas_src>
import functools

import jax
import jax.numpy as jnp
from jax.experimental import pallas as pl
from jax.experimental.pallas import tpu as pltpu


def _round_up(x, m):
    return (x + m - 1) // m * m


def _vmem_limit_bytes():
    """Generation-aware VMEM budget (v5e/v6e: 128 MiB, v7x: 64 MiB physical)."""
    try:
        info = pltpu.get_tpu_info()
        cap = int(getattr(info, "vmem_capacity_bytes", 0)) or (64 << 20)
    except Exception:  # interpret mode / non-TPU tracing
        cap = 64 << 20
    return min(int(cap * 3 // 4), 112 << 20)


# ---------------------------------------------------------------------------
# Kernel: (row block i, K block k) of    h = relu(x @ W1 + b1);  y = h @ W2 + b2
# acc_ref is an f32 (TM, HID) VMEM accumulator carried across the K axis.
# ---------------------------------------------------------------------------
def _mlp_kernel(x_ref, w1_ref, b1_ref, w2_ref, b2_ref, o_ref, acc_ref):
    k = pl.program_id(1)

    @pl.when(k == 0)
    def _():
        acc_ref[...] = jnp.zeros_like(acc_ref)

    # x stays f32 in HBM; cast on the VPU right before the MXU (no separate
    # XLA convert pass over the operand that changes every attack iteration).
    x_blk = x_ref[...].astype(w1_ref.dtype)
    acc_ref[...] += jnp.dot(x_blk, w1_ref[...],
                            preferred_element_type=jnp.float32)

    @pl.when(k == pl.num_programs(1) - 1)
    def _():
        h = jnp.maximum(acc_ref[...] + b1_ref[...], 0.0)
        y = jnp.dot(h.astype(w2_ref.dtype), w2_ref[...],
                    preferred_element_type=jnp.float32)
        o_ref[...] = (y + b2_ref[...]).astype(o_ref.dtype)


def prepare_params(w1, b1, w2, b2, compute_dtype=jnp.bfloat16):
    """One-time (outside the attack loop) cast + lane-pad of the wrap params.

    Doing this once instead of inside every jitted forward removes a
    read-4B/write-2B pass over W1 per call — pure wasted HBM bandwidth in an
    iterative attack loop.
    """
    D, HID = w1.shape
    NCLS = w2.shape[1]
    NP = _round_up(NCLS, 128)                       # lane-dense output width
    w1_c = jnp.asarray(w1, compute_dtype)
    w2_p = jnp.pad(jnp.asarray(w2, compute_dtype), ((0, 0), (0, NP - NCLS)))
    b1_r = jnp.asarray(b1, jnp.float32).reshape(1, HID)
    b2_p = jnp.pad(jnp.asarray(b2, jnp.float32).reshape(1, NCLS),
                   ((0, 0), (0, NP - NCLS)))
    return w1_c, b1_r, w2_p, b2_p, NCLS


@functools.partial(jax.jit, static_argnames=("subbatch", "ncls"))
def wrapped_model_forward(x_nchw, w1_c, b1_r, w2_p, b2_p, *, subbatch, ncls):
    """WrappedModel.forward.

    `subbatch` is part of the WrappedModel API; because the wrap model is
    row-independent, torch.cat(torch.split(x, subbatch)) through it equals a
    single full-batch application (including a ragged final chunk), so the
    kernel tiles rows for the MXU rather than by `subbatch`.
    """
    del subbatch  # semantics preserved by row-independence (see docstring)

    B, C, H, W = x_nchw.shape
    D = C * H * W
    HID = w1_c.shape[1]
    NP = w2_p.shape[1]

    x2d = x_nchw.reshape(B, D)          # view; no pad, no cast in the wrapper

    # --- row tile: >=16 (bf16 packing), cap 256 (2x256^2 MXU on v6e/v7x);
    #     split into >=2 row blocks when B allows so the "parallel" axis can
    #     shard across v7x's 2 TensorCores.  Ragged last block handled by
    #     Pallas (partial output store; padded rows never reach HBM).
    TM = min(_round_up(B, 16), 256)
    if B >= 32:
        TM = min(TM, _round_up(pl.cdiv(B, 2), 16))
    n_m = pl.cdiv(B, TM)

    # --- K tile over D: largest of {512, 256, 128} dividing D (exact split so
    #     no garbage enters the accumulator), else fall back to full D.
    TK = D
    for cand in (512, 256, 128):
        if D % cand == 0:
            TK = cand
            break
    n_k = D // TK

    cost = pl.CostEstimate(
        flops=2 * B * (D * HID + HID * NP),
        transcendentals=0,
        bytes_accessed=(B * D * x2d.dtype.itemsize
                        + n_m * D * HID * w1_c.dtype.itemsize
                        + HID * NP * w2_p.dtype.itemsize
                        + (HID + NP) * 4
                        + B * NP * 4),
    )

    out = pl.pallas_call(
        _mlp_kernel,
        out_shape=jax.ShapeDtypeStruct((B, NP), jnp.float32),
        grid_spec=pltpu.PrefetchScalarGridSpec(
            num_scalar_prefetch=0,
            grid=(n_m, n_k),
            in_specs=[
                # Streamed operands: default double-buffered pipeline.
                pl.BlockSpec((TM, TK), lambda i, k: (i, k)),     # x row/K block
                pl.BlockSpec((TK, HID), lambda i, k: (k, 0)),    # W1 K block
                # Invariant operands: single resident buffer (no double-buffer).
                pl.BlockSpec((1, HID), lambda i, k: (0, 0),
                             pipeline_mode=pl.Buffered(1)),      # b1
                pl.BlockSpec((HID, NP), lambda i, k: (0, 0),
                             pipeline_mode=pl.Buffered(1)),      # W2 (padded)
                pl.BlockSpec((1, NP), lambda i, k: (0, 0),
                             pipeline_mode=pl.Buffered(1)),      # b2 (padded)
            ],
            out_specs=pl.BlockSpec((TM, NP), lambda i, k: (i, 0)),
            scratch_shapes=[pltpu.VMEM((TM, HID), jnp.float32)],
        ),
        compiler_params=pltpu.CompilerParams(
            dimension_semantics=("parallel", "arbitrary"),
            vmem_limit_bytes=_vmem_limit_bytes(),
        ),
        cost_estimate=cost,
    )(x2d, w1_c, b1_r, w2_p, b2_p)

    # Strip lane padding back to (B, NCLS); logits kept in f32.
    return out[:, :ncls]


def _reference_forward(x_nchw, w1, b1, w2, b2, subbatch):
    """Pure-JAX reference reproducing WrappedModel semantics exactly."""
    B = x_nchw.shape[0]
    outs = []
    for s in range(0, B, subbatch):
        sb = x_nchw[s:s + subbatch]
        f = sb.reshape(sb.shape[0], -1)
        h = jnp.maximum(f @ w1 + b1, 0.0)
        outs.append(h @ w2 + b2)
    return jnp.concatenate(outs, axis=0)


if __name__ == "__main__":
    key = jax.random.PRNGKey(0)
    k_x, k_w1, k_b1, k_w2, k_b2 = jax.random.split(key, 5)

    # Small shapes consistent with an NCHW-image wrap model.
    B, C, H, W = 16, 4, 16, 16
    D = C * H * W          # 1024 -> TK=512, n_k=2 exercises the K-tiled accumulator
    HID = 128
    NCLS = 16
    SUBBATCH = 8

    x = jax.random.normal(k_x, (B, C, H, W), dtype=jnp.float32)
    # Deterministic synthetic parameters (no checkpoint load).
    w1 = jax.random.normal(k_w1, (D, HID), dtype=jnp.float32) * 0.02
    b1 = jax.random.normal(k_b1, (HID,), dtype=jnp.float32) * 0.01
    w2 = jax.random.normal(k_w2, (D and HID, NCLS), dtype=jnp.float32) * 0.05
    b2 = jax.random.normal(k_b2, (NCLS,), dtype=jnp.float32) * 0.01

    y_ref = _reference_forward(x, w1, b1, w2, b2, SUBBATCH)

    # f32 compute path (weights kept f32). Tolerance allows for the MXU's
    # internal bf16-pass decomposition of f32 matmuls.
    w1_c, b1_r, w2_p, b2_p, ncls = prepare_params(
        w1, b1, w2, b2, compute_dtype=jnp.float32)
    y32 = wrapped_model_forward(x, w1_c, b1_r, w2_p, b2_p,
                                subbatch=SUBBATCH, ncls=ncls)
    y32 = jax.block_until_ready(y32)
    assert y32.shape == (B, NCLS)
    assert jnp.allclose(y32, y_ref, atol=2e-2, rtol=2e-2), "f32 mismatch"

    # bf16 compute path (MXU fast path on v6e/v7x): looser tolerance.
    w1_c, b1_r, w2_p, b2_p, ncls = prepare_params(
        w1, b1, w2, b2, compute_dtype=jnp.bfloat16)
    ybf = wrapped_model_forward(x, w1_c, b1_r, w2_p, b2_p,
                                subbatch=SUBBATCH, ncls=ncls)
    ybf = jax.block_until_ready(ybf)
    assert ybf.shape == (B, NCLS)
    assert jnp.allclose(ybf, y_ref, atol=6e-2, rtol=6e-2), "bf16 mismatch"

    print("KERNEL_OK")
</pallas_src>

<mosaic_0001>
module attributes {stable_mosaic.version = 11 : i64} {
  func.func @_mlp_kernel(%arg0: i32, %arg1: i32, %arg2: memref<16x512xf32, #tpu.memory_space<vmem>>, %arg3: memref<512x128xf32, #tpu.memory_space<vmem>>, %arg4: memref<1x128xf32, #tpu.memory_space<vmem>>, %arg5: memref<128x128xf32, #tpu.memory_space<vmem>>, %arg6: memref<1x128xf32, #tpu.memory_space<vmem>>, %arg7: memref<16x128xf32, #tpu.memory_space<vmem>>, %arg8: memref<16x128xf32, #tpu.memory_space<vmem>>) attributes {dimension_semantics = [#tpu.dimension_semantics<parallel>, #tpu.dimension_semantics<arbitrary>], iteration_bounds = array<i64: 1, 2>, scalar_prefetch = 0 : i64, scratch_operands = 1 : i64, tpu.core_type = #tpu.core_type<tc>, window_params = [{transform_indices = @transform_0, window_bounds = array<i64: 16, 512>}, {transform_indices = @transform_1, window_bounds = array<i64: 512, 128>}, {pipeline_mode = #tpu.pipeline_mode<synchronous>, transform_indices = @transform_2, window_bounds = array<i64: 1, 128>}, {pipeline_mode = #tpu.pipeline_mode<synchronous>, transform_indices = @transform_3, window_bounds = array<i64: 128, 128>}, {pipeline_mode = #tpu.pipeline_mode<synchronous>, transform_indices = @transform_4, window_bounds = array<i64: 1, 128>}, {transform_indices = @transform_5, window_bounds = array<i64: 16, 128>}]} {
    %c0_i32 = arith.constant 0 : i32
    %0 = arith.cmpi eq, %arg1, %c0_i32 : i32
    %1 = arith.extui %0 : i1 to i32
    %c0_i32_0 = arith.constant 0 : i32
    %2 = arith.cmpi ne, %1, %c0_i32_0 : i32
    scf.if %2 {
      %cst_9 = arith.constant 0.000000e+00 : f32
      %12 = vector.broadcast %cst_9 : f32 to vector<16x128xf32>
      %c0_10 = arith.constant 0 : index
      %c0_11 = arith.constant 0 : index
      %13 = vector.load %arg8[%c0_10, %c0_11] : memref<16x128xf32, #tpu.memory_space<vmem>>, vector<16x128xf32>
      tpu.vector_store %arg8[%c0_10, %c0_11], %12 {strides = array<i32>} : memref<16x128xf32, #tpu.memory_space<vmem>>, vector<16x128xf32>,
    } else {
    }
    %c0 = arith.constant 0 : index
    %c0_1 = arith.constant 0 : index
    %3 = vector.load %arg2[%c0, %c0_1] : memref<16x512xf32, #tpu.memory_space<vmem>>, vector<16x512xf32>
    %c0_2 = arith.constant 0 : index
    %c0_3 = arith.constant 0 : index
    %4 = vector.load %arg8[%c0_2, %c0_3] : memref<16x128xf32, #tpu.memory_space<vmem>>, vector<16x128xf32>
    %c0_4 = arith.constant 0 : index
    %c0_5 = arith.constant 0 : index
    %5 = vector.load %arg3[%c0_4, %c0_5] : memref<512x128xf32, #tpu.memory_space<vmem>>, vector<512x128xf32>
    %cst = arith.constant dense<0.000000e+00> : vector<16x128xf32>
    %6 = tpu.matmul %3, %5, %cst {dimension_numbers = #tpu.dot_dimension_numbers<[1], [0], [0], [1], [0, 0, 1, 1], [], []>} : vector<16x512xf32>, vector<512x128xf32>, vector<16x128xf32> -> vector<16x128xf32>
    %7 = arith.addf %4, %6 : vector<16x128xf32>
    %c0_6 = arith.constant 0 : index
    %c0_7 = arith.constant 0 : index
    %8 = vector.load %arg8[%c0_6, %c0_7] : memref<16x128xf32, #tpu.memory_space<vmem>>, vector<16x128xf32>
    tpu.vector_store %arg8[%c0_6, %c0_7], %7 {strides = array<i32>} : memref<16x128xf32, #tpu.memory_space<vmem>>, vector<16x128xf32>,
    %c1_i32 = arith.constant 1 : i32
    %9 = arith.cmpi eq, %arg1, %c1_i32 : i32
    %10 = arith.extui %9 : i1 to i32
    %c0_i32_8 = arith.constant 0 : i32
    %11 = arith.cmpi ne, %10, %c0_i32_8 : i32
    scf.if %11 {
      %c0_9 = arith.constant 0 : index
      %c0_10 = arith.constant 0 : index
      %12 = vector.load %arg8[%c0_9, %c0_10] : memref<16x128xf32, #tpu.memory_space<vmem>>, vector<16x128xf32>
      %c0_11 = arith.constant 0 : index
      %c0_12 = arith.constant 0 : index
      %13 = vector.load %arg4[%c0_11, %c0_12] : memref<1x128xf32, #tpu.memory_space<vmem>>, vector<1x128xf32>
      %14 = vector.broadcast %13 : vector<1x128xf32> to vector<16x128xf32>
      %15 = arith.addf %12, %14 : vector<16x128xf32>
      %cst_13 = arith.constant 0.000000e+00 : f32
      %16 = vector.broadcast %cst_13 : f32 to vector<16x128xf32>
      %17 = arith.maximumf %15, %16 : vector<16x128xf32>
      %c0_14 = arith.constant 0 : index
      %c0_15 = arith.constant 0 : index
      %18 = vector.load %arg5[%c0_14, %c0_15] : memref<128x128xf32, #tpu.memory_space<vmem>>, vector<128x128xf32>
      %cst_16 = arith.constant dense<0.000000e+00> : vector<16x128xf32>
      %19 = tpu.matmul %17, %18, %cst_16 {dimension_numbers = #tpu.dot_dimension_numbers<[1], [0], [0], [1], [0, 0, 1, 1], [], []>} : vector<16x128xf32>, vector<128x128xf32>, vector<16x128xf32> -> vector<16x128xf32>
      %c0_17 = arith.constant 0 : index
      %c0_18 = arith.constant 0 : index
      %20 = vector.load %arg6[%c0_17, %c0_18] : memref<1x128xf32, #tpu.memory_space<vmem>>, vector<1x128xf32>
      %21 = vector.broadcast %20 : vector<1x128xf32> to vector<16x128xf32>
      %22 = arith.addf %19, %21 : vector<16x128xf32>
      %c0_19 = arith.constant 0 : index
      %c0_20 = arith.constant 0 : index
      %23 = vector.load %arg7[%c0_19, %c0_20] : memref<16x128xf32, #tpu.memory_space<vmem>>, vector<16x128xf32>
      tpu.vector_store %arg7[%c0_19, %c0_20], %22 {strides = array<i32>} : memref<16x128xf32, #tpu.memory_space<vmem>>, vector<16x128xf32>,
    } else {
    }
    return
  }
  func.func @transform_0(%arg0: i32, %arg1: i32) -> (i32, i32) {
    %c0_i32 = arith.constant 0 : i32
    return %arg0, %arg1 : i32, i32
  }
  func.func @transform_1(%arg0: i32, %arg1: i32) -> (i32, i32) {
    %c0_i32 = arith.constant 0 : i32
    %c0_i32_0 = arith.constant 0 : i32
    return %arg1, %c0_i32 : i32, i32
  }
  func.func @transform_2(%arg0: i32, %arg1: i32) -> (i32, i32) {
    %c0_i32 = arith.constant 0 : i32
    %c0_i32_0 = arith.constant 0 : i32
    %c0_i32_1 = arith.constant 0 : i32
    return %c0_i32, %c0_i32_0 : i32, i32
  }
  func.func @transform_3(%arg0: i32, %arg1: i32) -> (i32, i32) {
    %c0_i32 = arith.constant 0 : i32
    %c0_i32_0 = arith.constant 0 : i32
    %c0_i32_1 = arith.constant 0 : i32
    return %c0_i32, %c0_i32_0 : i32, i32
  }
  func.func @transform_4(%arg0: i32, %arg1: i32) -> (i32, i32) {
    %c0_i32 = arith.constant 0 : i32
    %c0_i32_0 = arith.constant 0 : i32
    %c0_i32_1 = arith.constant 0 : i32
    return %c0_i32, %c0_i32_0 : i32, i32
  }
  func.func @transform_5(%arg0: i32, %arg1: i32) -> (i32, i32) {
    %c0_i32 = arith.constant 0 : i32
    %c0_i32_0 = arith.constant 0 : i32
    return %arg0, %c0_i32 : i32, i32
  }
}

</mosaic_0001>

<llo_original>
// kernel: wrapped_model_forward.1
$region0: #{wrapped_model_forward.1}
  #allocation0 [shape = 'u32[]', space=smem, size = 0x4, offset = 0x4, fixed_abs, tag = 'smem constant byte address 0x4 - core index']
  #allocation1 [shape = 'u32[144,128]{1,0:T(1,128)}', space=vmem, size = 0x12000, scoped, tag = 'internal scratch']
  #allocation2 [shape = 'f32[16,128]{1,0:T(8,128)}', space=vmem, size = 0x2000, scoped, tag = 'scratch operand']
  %s0 = inlined_call_operand.vmem [shape: f32[16,1024], index: 0, kind: input, shape index: {}]
  %s1 = inlined_call_operand.vmem [shape: f32[1024,128], index: 1, kind: input, shape index: {}]
  %s2 = inlined_call_operand.vmem [shape: f32[1,128], index: 2, kind: input, shape index: {}]
  %s3 = inlined_call_operand.vmem [shape: f32[128,128], index: 3, kind: input, shape index: {}]
  %s4 = inlined_call_operand.hbm [shape: f32[1,128], index: 4, kind: input, shape index: {}]
  %s5 = inlined_call_operand.hbm [shape: f32[16,128], index: 5, kind: output, shape index: {}]
  %s6 = sld [smem:[#allocation0]]
  $region88: #{wrapped_model_forward.1} parent=0
    _
  %s8 = ssub.s32 1, %s6
  %s9 = scalar_select 0, %s8, %s6
  $region1: #{wrapped_model_forward.1} parent=0
    #allocation3 [shape = 'u8[65536]{0}', space=vmem, size = 0x10000, scoped, tag = 'input window, operand 0']
    #allocation4 [shape = 'u8[512]{0}', space=vmem, size = 0x400, scoped, tag = 'input window, operand 4, single buffered']
    #allocation5 [shape = 's32[2]{0}', space=sflag, size = 0x8, scoped, tag = 'scoped memory for wrapped_model_forward.1']
    #allocation6 [shape = 's32[2]{0}', space=sflag, size = 0x8, scoped, tag = 'scoped memory for wrapped_model_forward.1']
    #allocation7 [shape = 'u8[8192]{0}', space=vmem, size = 0x2000, scoped, tag = 'output window, operand 0, single buffered']
    %10 = vsyncpa [#allocation5], 0
    %11 = vsyncpa [#allocation6], 0
    loop: start=0, step=1, limit=4
    $region2: #{wrapped_model_forward.1} parent=1 // loop_pre_header
      _
    $region3: #{wrapped_model_forward.1} parent=1 // loop_header
      %s13 = sphi 0, %s17
      %p14 = scmp.ge.s32.totalorder %s13, 4
      %s20 = sphi 0, %s32
      %s21 = sphi 0, %s28
      %s22 = sphi 0, %s20
      %s23 = sphi 0, %s21
      %s24 = sphi 0, %s22
      %s25 = sphi 0, %s23
      %s37 = sphi 0, %s39
      %s40 = sphi 0, %s37
      %s41 = sphi 0, %s40
      %s57 = sphi 0, %s41
      %s63 = sphi 0, %s65
      %s66 = sphi 0, %s63
      %s67 = sphi 0, %s66
      %s83 = sphi 0, %s67
      %s87 = sphi 0, %s87
      %s89 = sphi 0, %s87
      %s90 = sphi 0, %s89
      %s104 = sphi 0, %s90
      %s108 = sphi 0, %s108
      %s110 = sphi 0, %s108
      %s111 = sphi 0, %s110
      %s125 = sphi 0, %s111
      %s129 = sphi 0, %s129
      %s131 = sphi 0, %s129
      %s132 = sphi 0, %s131
      %s146 = sphi 0, %s132
      %s152 = sphi 0, %s154
      %s155 = sphi 0, %s152
      %s156 = sphi 0, %s155
      %s172 = sphi 0, %s156
    $region4: #{wrapped_model_forward.1} parent=1 // loop_header_branch
      %16 = sbr.rel (%p14) target = $region8
    $region5: #{wrapped_model_forward.1} parent=1 // loop_body
      %s18 = ssub.s32 %s13, 1
      %s19 = ssub.s32 %s13, 2
      %s26 = sadd.s32 1, %s21
      %p27 = scmp.ge.s32.totalorder %s26, 2
      %s28 = scalar_select %p27, 0, %s26
      %s29 = sadd.s32 1, %s20
      %s30 = scalar_select %p27, %s29, %s20
      %p31 = scmp.ge.s32.totalorder %s30, 1
      %s32 = scalar_select %p31, 0, %s30
      %s33 = ssub.s32 %s20, %s32
      %s34 = ssub.s32 %s21, %s28
      %s35 = sor.u32 %s33, %s34
      %p36 = scmp.eq.s32.totalorder %s35, 0
      %s38 = sadd.s32 %s37, 1
      %s39 = scalar_select %p36, %s37, %s38
      %p42 = pneg %p36
      %p43 = scmp.eq.s32.totalorder %s13, 1
      %p44 = por %p42, %p43
      %p45 = scmp.ne.s32.totalorder %s37, %s40
      %p46 = scmp.eq.s32.totalorder %s13, 0
      %p47 = por %p45, %p46
      %p48 = scmp.ne.s32.totalorder %s37, %s40
      %p49 = scmp.eq.s32.totalorder %s18, 1
      %p50 = por %p48, %p49
      %p51 = scmp.ne.s32.totalorder %s40, %s41
      %p52 = scmp.eq.s32.totalorder %s18, 0
      %p53 = por %p51, %p52
      %p54 = scmp.ne.s32.totalorder %s40, %s41
      %p55 = scmp.eq.s32.totalorder %s19, 1
      %p56 = por %p54, %p55
      %p58 = scmp.ne.s32.totalorder %s41, %s57
      %p59 = scmp.eq.s32.totalorder %s19, 0
      %p60 = por %p58, %p59
      %s61 = ssub.s32 %s21, %s28
      %p62 = scmp.eq.s32.totalorder %s61, 0
      %s64 = sadd.s32 %s63, 1
      %s65 = scalar_select %p62, %s63, %s64
      %p68 = pneg %p62
      %p69 = scmp.eq.s32.totalorder %s13, 1
      %p70 = por %p68, %p69
      %p71 = scmp.ne.s32.totalorder %s63, %s66
      %p72 = scmp.eq.s32.totalorder %s13, 0
      %p73 = por %p71, %p72
      %p74 = scmp.ne.s32.totalorder %s63, %s66
      %p75 = scmp.eq.s32.totalorder %s18, 1
      %p76 = por %p74, %p75
      %p77 = scmp.ne.s32.totalorder %s66, %s67
      %p78 = scmp.eq.s32.totalorder %s18, 0
      %p79 = por %p77, %p78
      %p80 = scmp.ne.s32.totalorder %s66, %s67
      %p81 = scmp.eq.s32.totalorder %s19, 1
      %p82 = por %p80, %p81
      %p84 = scmp.ne.s32.totalorder %s67, %s83
      %p85 = scmp.eq.s32.totalorder %s19, 0
      %p86 = por %p84, %p85
      %s88 = sadd.s32 %s87, 1
      %p91 = scmp.eq.s32.totalorder %s13, 1
      %p92 = scmp.ne.s32.totalorder %s87, %s89
      %p93 = scmp.eq.s32.totalorder %s13, 0
      %p94 = por %p92, %p93
      %p95 = scmp.ne.s32.totalorder %s87, %s89
      %p96 = scmp.eq.s32.totalorder %s18, 1
      %p97 = por %p95, %p96
      %p98 = scmp.ne.s32.totalorder %s89, %s90
      %p99 = scmp.eq.s32.totalorder %s18, 0
      %p100 = por %p98, %p99
      %p101 = scmp.ne.s32.totalorder %s89, %s90
      %p102 = scmp.eq.s32.totalorder %s19, 1
      %p103 = por %p101, %p102
      %p105 = scmp.ne.s32.totalorder %s90, %s104
      %p106 = scmp.eq.s32.totalorder %s19, 0
      %p107 = por %p105, %p106
      %s109 = sadd.s32 %s108, 1
      %p112 = scmp.eq.s32.totalorder %s13, 1
      %p113 = scmp.ne.s32.totalorder %s108, %s110
      %p114 = scmp.eq.s32.totalorder %s13, 0
      %p115 = por %p113, %p114
      %p116 = scmp.ne.s32.totalorder %s108, %s110
      %p117 = scmp.eq.s32.totalorder %s18, 1
      %p118 = por %p116, %p117
      %p119 = scmp.ne.s32.totalorder %s110, %s111
      %p120 = scmp.eq.s32.totalorder %s18, 0
      %p121 = por %p119, %p120
      %p122 = scmp.ne.s32.totalorder %s110, %s111
      %p123 = scmp.eq.s32.totalorder %s19, 1
      %p124 = por %p122, %p123
      %p126 = scmp.ne.s32.totalorder %s111, %s125
      %p127 = scmp.eq.s32.totalorder %s19, 0
      %p128 = por %p126, %p127
      %s130 = sadd.s32 %s129, 1
      %p133 = scmp.eq.s32.totalorder %s13, 1
      %p134 = scmp.ne.s32.totalorder %s129, %s131
      %p135 = scmp.eq.s32.totalorder %s13, 0
      %p136 = por %p134, %p135
      %p137 = scmp.ne.s32.totalorder %s129, %s131
      %p138 = scmp.eq.s32.totalorder %s18, 1
      %p139 = por %p137, %p138
      %p140 = scmp.ne.s32.totalorder %s131, %s132
      %p141 = scmp.eq.s32.totalorder %s18, 0
      %p142 = por %p140, %p141
      %p143 = scmp.ne.s32.totalorder %s131, %s132
      %p144 = scmp.eq.s32.totalorder %s19, 1
      %p145 = por %p143, %p144
      %p147 = scmp.ne.s32.totalorder %s132, %s146
      %p148 = scmp.eq.s32.totalorder %s19, 0
      %p149 = por %p147, %p148
      %s150 = ssub.s32 %s20, %s32
      %p151 = scmp.eq.s32.totalorder %s150, 0
      %s153 = sadd.s32 %s152, 1
      %s154 = scalar_select %p151, %s152, %s153
      %p157 = pneg %p151
      %p158 = scmp.eq.s32.totalorder %s13, 1
      %p159 = por %p157, %p158
      %p160 = scmp.ne.s32.totalorder %s152, %s155
      %p161 = scmp.eq.s32.totalorder %s13, 0
      %p162 = por %p160, %p161
      %p163 = scmp.ne.s32.totalorder %s152, %s155
      %p164 = scmp.eq.s32.totalorder %s18, 1
      %p165 = por %p163, %p164
      %p166 = scmp.ne.s32.totalorder %s155, %s156
      %p167 = scmp.eq.s32.totalorder %s18, 0
      %p168 = por %p166, %p167
      %p169 = scmp.ne.s32.totalorder %s155, %s156
      %p170 = scmp.eq.s32.totalorder %s19, 1
      %p171 = por %p169, %p170
      %p173 = scmp.ne.s32.totalorder %s156, %s172
      %p174 = scmp.eq.s32.totalorder %s19, 0
      %p175 = por %p173, %p174
      %p176 = scmp.le.s32.totalorder 1, %s13
      %p177 = scmp.lt.s32.totalorder %s13, 3
      %p178 = pnand %p176, %p177
      %p179 = pneg %p178
      // Predicated region
      $region9: #{wrapped_model_forward.1} parent=5 // pred_check
        _
      $region10: #{wrapped_model_forward.1} parent=5 // pred_check_branch
        %181 = sbr.rel (%p178) target = $region12
      $region11: #{wrapped_model_forward.1} parent=5 // pred_region
        %s182 = ssub.s32 %s13, 1
        // Predicated region
        $region13: #{wrapped_model_forward.1} parent=11 // pred_check
          %p183 = pneg %p100
        $region14: #{wrapped_model_forward.1} parent=11 // pred_check_branch
          %185 = sbr.rel (%p183) target = $region16
        $region15: #{wrapped_model_forward.1} parent=11 // pred_region
          _
        $region16: #{wrapped_model_forward.1} parent=11 // pred_fallthru
          _
        // Predicated region
        $region17: #{wrapped_model_forward.1} parent=11 // pred_check
          %p186 = pneg %p121
        $region18: #{wrapped_model_forward.1} parent=11 // pred_check_branch
          %188 = sbr.rel (%p186) target = $region20
        $region19: #{wrapped_model_forward.1} parent=11 // pred_region
          _
        $region20: #{wrapped_model_forward.1} parent=11 // pred_fallthru
          _
        // Predicated region
        $region21: #{wrapped_model_forward.1} parent=11 // pred_check
          %p189 = pneg %p142
        $region22: #{wrapped_model_forward.1} parent=11 // pred_check_branch
          %191 = sbr.rel (%p189) target = $region24
        $region23: #{wrapped_model_forward.1} parent=11 // pred_region
          %s193 = ssub.s32 16, 16
          %194 = vsyncadd [#allocation5], %s193
          %s196 = sshll.u32 [#allocation4], 4
          %s197 = int_to_ptr.vmem [resolvable:$true] %s196
          %199 = dma.hbm_to_vmem [thread:$0]  %s4, 16, %s197, [#allocation5]
        $region24: #{wrapped_model_forward.1} parent=11 // pred_fallthru
          _
      $region12: #{wrapped_model_forward.1} parent=5 // pred_fallthru
        _
      %p200 = scmp.lt.s32.totalorder %s13, 2
      // Predicated region
      $region25: #{wrapped_model_forward.1} parent=5 // pred_check
        %p201 = pneg %p200
      $region26: #{wrapped_model_forward.1} parent=5 // pred_check_branch
        %203 = sbr.rel (%p201) target = $region28
      $region27: #{wrapped_model_forward.1} parent=5 // pred_region
        // Predicated region
        $region29: #{wrapped_model_forward.1} parent=27 // pred_check
          %p204 = pneg %p47
        $region30: #{wrapped_model_forward.1} parent=27 // pred_check_branch
          %206 = sbr.rel (%p204) target = $region32
        $region31: #{wrapped_model_forward.1} parent=27 // pred_region
          %s207 = sand.u32 %s37, 1
          %s208 = sand.u32 %s37, 1
          %s209 = smul.addr %s208, 64
          %s210 = scalar_lea.vmem [#allocation3], %s209
          %s211 = smul.u32 2, %s20
          %s212 = smul.u32 4, %s21
          %s213 = smul.addr %s211, 8
          %s214 = sadd.s32 %s212, %s213
          %s215 = smul.addr %s214, 8
          %s216 = scalar_lea.vmem %s0, %s215
          // Predicated region
          $region33: #{wrapped_model_forward.1} parent=31 // pred_check
            _
          $region34: #{wrapped_model_forward.1} parent=31 // pred_check_branch
            %218 = sbr.rel (0) target = $region36
          $region35: #{wrapped_model_forward.1} parent=31 // pred_region
            // Predicated region
            $region37: #{wrapped_model_forward.1} parent=35 // pred_check
              _
            $region38: #{wrapped_model_forward.1} parent=35 // pred_check_branch
              %220 = sbr.rel (0) target = $region40
            $region39: #{wrapped_model_forward.1} parent=35 // pred_region
              loop: start=0, step=1, limit=1
              $region41: #{wrapped_model_forward.1} parent=39 // loop_pre_header
                _
              $region42: #{wrapped_model_forward.1} parent=39 // loop_header
                %s222 = sphi 0, %s226
                %p223 = scmp.ge.s32.totalorder %s222, 1
                %s227 = sphi %s216, %s216
                %s228 = sphi %s210, %s210
              $region43: #{wrapped_model_forward.1} parent=39 // loop_header_branch
                %225 = sbr.rel (%p223) target = $region47
              $region44: #{wrapped_model_forward.1} parent=39 // loop_body
                %v229 = vld [vmem:[%s227] sm:$0xff]
                %230 = vst [vmem:[%s228] sm:$0xff] %v229
                %v231 = vld [vmem:[%s227 + $0x8] sm:$0xff]
                %232 = vst [vmem:[%s228 + $0x8] sm:$0xff] %v231
                %v233 = vld [vmem:[%s227 + $0x10] sm:$0xff]
                %234 = vst [vmem:[%s228 + $0x10] sm:$0xff] %v233
                %v235 = vld [vmem:[%s227 + $0x18] sm:$0xff]
                %236 = vst [vmem:[%s228 + $0x18] sm:$0xff] %v235
                %v237 = vld [vmem:[%s227 + $0x40] sm:$0xff]
                %238 = vst [vmem:[%s228 + $0x20] sm:$0xff] %v237
                %v239 = vld [vmem:[%s227 + $0x48] sm:$0xff]
                %240 = vst [vmem:[%s228 + $0x28] sm:$0xff] %v239
                %v241 = vld [vmem:[%s227 + $0x50] sm:$0xff]
                %242 = vst [vmem:[%s228 + $0x30] sm:$0xff] %v241
                %v243 = vld [vmem:[%s227 + $0x58] sm:$0xff]
                %244 = vst [vmem:[%s228 + $0x38] sm:$0xff] %v243
              $region45: #{wrapped_model_forward.1} parent=39 // loop_footer
                %s226 = sadd.s32 1, %s222
              $region46: #{wrapped_model_forward.1} parent=39 // loop_footer_branch
                %221 = sbr.rel target = $region42
              $region47: #{wrapped_model_forward.1} parent=39 // loop_exit
                _
            $region40: #{wrapped_model_forward.1} parent=35 // pred_fallthru
              _
            // Predicated region
            $region48: #{wrapped_model_forward.1} parent=35 // pred_check
              _
            $region49: #{wrapped_model_forward.1} parent=35 // pred_check_branch
              %246 = sbr.rel target = $region51
            $region50: #{wrapped_model_forward.1} parent=35 // pred_region
              _
            $region51: #{wrapped_model_forward.1} parent=35 // pred_fallthru
              _
          $region36: #{wrapped_model_forward.1} parent=31 // pred_fallthru
            _
          %247 = vnop
        $region32: #{wrapped_model_forward.1} parent=27 // pred_fallthru
          _
        // Predicated region
        $region52: #{wrapped_model_forward.1} parent=27 // pred_check
          %p248 = pneg %p73
        $region53: #{wrapped_model_forward.1} parent=27 // pred_check_branch
          %250 = sbr.rel (%p248) target = $region55
        $region54: #{wrapped_model_forward.1} parent=27 // pred_region
          %s251 = smul.u32 64, %s21
          %p252 = scmp.lt.s32.totalorder %s251, 127
          %s253 = scalar_select %p252, %s251, 127
          %s254 = smul.addr %s253, 8
          %s255 = scalar_lea.vmem %s1, %s254
          %s256 = smul.u32 64, %s21
        $region55: #{wrapped_model_forward.1} parent=27 // pred_fallthru
          _
      $region28: #{wrapped_model_forward.1} parent=5 // pred_fallthru
        _
      %p257 = scmp.le.s32.totalorder 1, %s13
      %p258 = scmp.lt.s32.totalorder %s13, 3
      %p259 = pnand %p257, %p258
      %p260 = pneg %p259
      // Predicated region
      $region56: #{wrapped_model_forward.1} parent=5 // pred_check
        _
      $region57: #{wrapped_model_forward.1} parent=5 // pred_check_branch
        %262 = sbr.rel (%p259) target = $region59
      $region58: #{wrapped_model_forward.1} parent=5 // pred_region
        %s263 = ssub.s32 %s13, 1
        %s264 = sand.u32 %s40, 1
        %s265 = sand.u32 %s40, 1
        %s266 = smul.addr %s265, 64
        %s267 = scalar_lea.vmem [#allocation3], %s266
        // Predicated region
        $region60: #{wrapped_model_forward.1} parent=58 // pred_check
          %p268 = pneg %p53
        $region61: #{wrapped_model_forward.1} parent=58 // pred_check_branch
          %270 = sbr.rel (%p268) target = $region63
        $region62: #{wrapped_model_forward.1} parent=58 // pred_region
          _
        $region63: #{wrapped_model_forward.1} parent=58 // pred_fallthru
          _
        // Predicated region
        $region64: #{wrapped_model_forward.1} parent=58 // pred_check
          %p271 = pneg %p142
        $region65: #{wrapped_model_forward.1} parent=58 // pred_check_branch
          %273 = sbr.rel (%p271) target = $region67
        $region66: #{wrapped_model_forward.1} parent=58 // pred_region
          %274 = dma.done [#allocation5], 16
        $region67: #{wrapped_model_forward.1} parent=58 // pred_fallthru
          _
        %s275 = sand.u32 %s40, 1
        %s276 = sand.u32 %s40, 1
        %s277 = smul.addr %s276, 64
        %s278 = scalar_lea.vmem [#allocation3], %s277
        %p279 = pneg %p53
        %p280 = pneg %p50
        %s281 = smul.u32 64, %s23
        %p282 = scmp.lt.s32.totalorder %s281, 127
        %s283 = scalar_select %p282, %s281, 127
        %s284 = smul.addr %s283, 8
        %s285 = scalar_lea.vmem %s1, %s284
        %p286 = pneg %p79
        %p287 = pneg %p76
        %p288 = pneg %p100
        %p289 = pneg %p97
        %p290 = pneg %p121
        %p291 = pneg %p118
        %p292 = pneg %p142
        %p293 = pneg %p139
        %p294 = pneg %p168
        %p295 = pneg %p165
        %s296 = smul.u32 2, %s22
        %s297 = smul.u32 4, %s23
        %s298 = smul.u32 64, %s23
        %p299 = scmp.lt.s32.totalorder %s298, 127
        %s300 = scalar_select %p299, %s298, 127
        %s301 = smul.addr %s300, 8
        %s302 = scalar_lea.vmem %s1, %s301
        %s303 = smul.u32 64, %s23
        %s304 = smul.u32 2, %s22
        %p305 = scmp.eq.s32.totalorder %s23, 0
        // Predicated region
        $region68: #{wrapped_model_forward.1} parent=58 // pred_check
          %p306 = pneg %p305
        $region69: #{wrapped_model_forward.1} parent=58 // pred_check_branch
          %308 = sbr.rel (%p306) target = $region71
        $region70: #{wrapped_model_forward.1} parent=58 // pred_region
          %309 = vst [vmem:[#allocation2] sm:$0xff] 0.0
          %310 = vst [vmem:[#allocation2 + $0x8] sm:$0xff] 0.0
        $region71: #{wrapped_model_forward.1} parent=58 // pred_fallthru
          _
        %v311 = vld [vmem:[%s267] sm:$0xff]
        %v312 = vld [vmem:[%s267 + $0x8] sm:$0xff]
        %v313 = vld [vmem:[%s267 + $0x10] sm:$0xff]
        %v314 = vld [vmem:[%s267 + $0x18] sm:$0xff]
        %v315 = vld [vmem:[%s267 + $0x20] sm:$0xff]
        %v316 = vld [vmem:[%s267 + $0x28] sm:$0xff]
        %v317 = vld [vmem:[%s267 + $0x30] sm:$0xff]
        %v318 = vld [vmem:[%s267 + $0x38] sm:$0xff]
        %v319 = vld [vmem:[#allocation2] sm:$0xff]
        %v320 = vld [vmem:[#allocation2 + $0x8] sm:$0xff]
        %v321 = vld [vmem:[%s302] sm:$0xff]
        %v322 = vld [vmem:[%s302 + $0x8] sm:$0xff]
        %v323 = vld [vmem:[%s302 + $0x10] sm:$0xff]
        %v324 = vld [vmem:[%s302 + $0x18] sm:$0xff]
        %v325 = vld [vmem:[%s302 + $0x20] sm:$0xff]
        %v326 = vld [vmem:[%s302 + $0x28] sm:$0xff]
        %v327 = vld [vmem:[%s302 + $0x30] sm:$0xff]
        %v328 = vld [vmem:[%s302 + $0x38] sm:$0xff]
        %v329 = vld [vmem:[%s302 + $0x40] sm:$0xff]
        %v330 = vld [vmem:[%s302 + $0x48] sm:$0xff]
        %v331 = vld [vmem:[%s302 + $0x50] sm:$0xff]
        %v332 = vld [vmem:[%s302 + $0x58] sm:$0xff]
        %v333 = vld [vmem:[%s302 + $0x60] sm:$0xff]
        %v334 = vld [vmem:[%s302 + $0x68] sm:$0xff]
        %v335 = vld [vmem:[%s302 + $0x70] sm:$0xff]
        %v336 = vld [vmem:[%s302 + $0x78] sm:$0xff]
        %v337 = vld [vmem:[%s302 + $0x80] sm:$0xff]
        %v338 = vld [vmem:[%s302 + $0x88] sm:$0xff]
        %v339 = vld [vmem:[%s302 + $0x90] sm:$0xff]
        %v340 = vld [vmem:[%s302 + $0x98] sm:$0xff]
        %v341 = vld [vmem:[%s302 + $0xa0] sm:$0xff]
        %v342 = vld [vmem:[%s302 + $0xa8] sm:$0xff]
        %v343 = vld [vmem:[%s302 + $0xb0] sm:$0xff]
        %v344 = vld [vmem:[%s302 + $0xb8] sm:$0xff]
        %v345 = vld [vmem:[%s302 + $0xc0] sm:$0xff]
        %v346 = vld [vmem:[%s302 + $0xc8] sm:$0xff]
        %v347 = vld [vmem:[%s302 + $0xd0] sm:$0xff]
        %v348 = vld [vmem:[%s302 + $0xd8] sm:$0xff]
        %v349 = vld [vmem:[%s302 + $0xe0] sm:$0xff]
        %v350 = vld [vmem:[%s302 + $0xe8] sm:$0xff]
        %v351 = vld [vmem:[%s302 + $0xf0] sm:$0xff]
        %v352 = vld [vmem:[%s302 + $0xf8] sm:$0xff]
        %v353 = vld [vmem:[%s302 + $0x100] sm:$0xff]
        %v354 = vld [vmem:[%s302 + $0x108] sm:$0xff]
        %v355 = vld [vmem:[%s302 + $0x110] sm:$0xff]
        %v356 = vld [vmem:[%s302 + $0x118] sm:$0xff]
        %v357 = vld [vmem:[%s302 + $0x120] sm:$0xff]
        %v358 = vld [vmem:[%s302 + $0x128] sm:$0xff]
        %v359 = vld [vmem:[%s302 + $0x130] sm:$0xff]
        %v360 = vld [vmem:[%s302 + $0x138] sm:$0xff]
        %v361 = vld [vmem:[%s302 + $0x140] sm:$0xff]
        %v362 = vld [vmem:[%s302 + $0x148] sm:$0xff]
        %v363 = vld [vmem:[%s302 + $0x150] sm:$0xff]
        %v364 = vld [vmem:[%s302 + $0x158] sm:$0xff]
        %v365 = vld [vmem:[%s302 + $0x160] sm:$0xff]
        %v366 = vld [vmem:[%s302 + $0x168] sm:$0xff]
        %v367 = vld [vmem:[%s302 + $0x170] sm:$0xff]
        %v368 = vld [vmem:[%s302 + $0x178] sm:$0xff]
        %v369 = vld [vmem:[%s302 + $0x180] sm:$0xff]
        %v370 = vld [vmem:[%s302 + $0x188] sm:$0xff]
        %v371 = vld [vmem:[%s302 + $0x190] sm:$0xff]
        %v372 = vld [vmem:[%s302 + $0x198] sm:$0xff]
        %v373 = vld [vmem:[%s302 + $0x1a0] sm:$0xff]
        %v374 = vld [vmem:[%s302 + $0x1a8] sm:$0xff]
        %v375 = vld [vmem:[%s302 + $0x1b0] sm:$0xff]
        %v376 = vld [vmem:[%s302 + $0x1b8] sm:$0xff]
        %v377 = vld [vmem:[%s302 + $0x1c0] sm:$0xff]
        %v378 = vld [vmem:[%s302 + $0x1c8] sm:$0xff]
        %v379 = vld [vmem:[%s302 + $0x1d0] sm:$0xff]
        %v380 = vld [vmem:[%s302 + $0x1d8] sm:$0xff]
        %v381 = vld [vmem:[%s302 + $0x1e0] sm:$0xff]
        %v382 = vld [vmem:[%s302 + $0x1e8] sm:$0xff]
        %v383 = vld [vmem:[%s302 + $0x1f0] sm:$0xff]
        %v384 = vld [vmem:[%s302 + $0x1f8] sm:$0xff]
        %385 = vmatprep.subr.mxu0 0.0
        %386 = vmatpush1.msra.mxu0 %v336
        %387 = vmatprep.subr.mxu0 0.0
        %388 = vmatpush1.msra.mxu0 %v335
        %389 = vmatprep.subr.mxu0 0.0
        %390 = vmatpush1.msra.mxu0 %v334
        %391 = vmatprep.subr.mxu0 0.0
        %392 = vmatpush1.msra.mxu0 %v333
        %393 = vmatprep.subr.mxu0 0.0
        %394 = vmatpush1.msra.mxu0 %v332
        %395 = vmatprep.subr.mxu0 0.0
        %396 = vmatpush1.msra.mxu0 %v331
        %397 = vmatprep.subr.mxu0 0.0
        %398 = vmatpush1.msra.mxu0 %v330
        %399 = vmatprep.subr.mxu0 0.0
        %400 = vmatpush1.msra.mxu0 %v329
        %401 = vmatprep.subr.mxu0 0.0
        %402 = vmatpush1.msra.mxu0 %v328
        %403 = vmatprep.subr.mxu0 0.0
        %404 = vmatpush1.msra.mxu0 %v327
        %405 = vmatprep.subr.mxu0 0.0
        %406 = vmatpush1.msra.mxu0 %v326
        %407 = vmatprep.subr.mxu0 0.0
        %408 = vmatpush1.msra.mxu0 %v325
        %409 = vmatprep.subr.mxu0 0.0
        %410 = vmatpush1.msra.mxu0 %v324
        %411 = vmatprep.subr.mxu0 0.0
        %412 = vmatpush1.msra.mxu0 %v323
        %413 = vmatprep.subr.mxu0 0.0
        %414 = vmatpush1.msra.mxu0 %v322
        %415 = vmatprep.subr.mxu0 0.0
        %416 = vmatpush1.msra.mxu0 %v321
        %417 = vmatprep.subr.mxu0 0.0
        %418 = vmatpush2.msra.mxu0 %v352
        %419 = vmatprep.subr.mxu0 0.0
        %420 = vmatpush2.msra.mxu0 %v351
        %421 = vmatprep.subr.mxu0 0.0
        %422 = vmatpush2.msra.mxu0 %v350
        %423 = vmatprep.subr.mxu0 0.0
        %424 = vmatpush2.msra.mxu0 %v349
        %425 = vmatprep.subr.mxu0 0.0
        %426 = vmatpush2.msra.mxu0 %v348
        %427 = vmatprep.subr.mxu0 0.0
        %428 = vmatpush2.msra.mxu0 %v347
        %429 = vmatprep.subr.mxu0 0.0
        %430 = vmatpush2.msra.mxu0 %v346
        %431 = vmatprep.subr.mxu0 0.0
        %432 = vmatpush2.msra.mxu0 %v345
        %433 = vmatprep.subr.mxu0 0.0
        %434 = vmatpush2.msra.mxu0 %v344
        %435 = vmatprep.subr.mxu0 0.0
        %436 = vmatpush2.msra.mxu0 %v343
        %437 = vmatprep.subr.mxu0 0.0
        %438 = vmatpush2.msra.mxu0 %v342
        %439 = vmatprep.subr.mxu0 0.0
        %440 = vmatpush2.msra.mxu0 %v341
        %441 = vmatprep.subr.mxu0 0.0
        %442 = vmatpush2.msra.mxu0 %v340
        %443 = vmatprep.subr.mxu0 0.0
        %444 = vmatpush2.msra.mxu0 %v339
        %445 = vmatprep.subr.mxu0 0.0
        %446 = vmatpush2.msra.mxu0 %v338
        %447 = vmatprep.subr.mxu0 0.0
        %448 = vmatpush2.msra.mxu0 %v337
        %449 = vmatprep.mubr.f32.mxu0 %v312
        %450 = vmatmul.mubr.f32.gmra.mxu0 %v311
        %v451 = vpop.f32.mrf.mxu0
        %v452 = vadd.f32 0.0, %v451
        %v453 = vpop.f32.mrf.mxu0
        %454 = vmatprep.mubr.f32.mxu0 %v316
        %455 = vmatmul.mubr.f32.gmra.mxu0 %v315
        %v456 = vpop.f32.mrf.mxu0
        %v457 = vadd.f32 0.0, %v456
        %v458 = vpop.f32.mrf.mxu0
        %459 = vdwg.mxu0
        %460 = vmatprep.subr.mxu0 0.0
        %461 = vmatpush1.msra.mxu0 %v368
        %462 = vmatprep.subr.mxu0 0.0
        %463 = vmatpush1.msra.mxu0 %v367
        %464 = vmatprep.subr.mxu0 0.0
        %465 = vmatpush1.msra.mxu0 %v366
        %466 = vmatprep.subr.mxu0 0.0
        %467 = vmatpush1.msra.mxu0 %v365
        %468 = vmatprep.subr.mxu0 0.0
        %469 = vmatpush1.msra.mxu0 %v364
        %470 = vmatprep.subr.mxu0 0.0
        %471 = vmatpush1.msra.mxu0 %v363
        %472 = vmatprep.subr.mxu0 0.0
        %473 = vmatpush1.msra.mxu0 %v362
        %474 = vmatprep.subr.mxu0 0.0
        %475 = vmatpush1.msra.mxu0 %v361
        %476 = vmatprep.subr.mxu0 0.0
        %477 = vmatpush1.msra.mxu0 %v360
        %478 = vmatprep.subr.mxu0 0.0
        %479 = vmatpush1.msra.mxu0 %v359
        %480 = vmatprep.subr.mxu0 0.0
        %481 = vmatpush1.msra.mxu0 %v358
        %482 = vmatprep.subr.mxu0 0.0
        %483 = vmatpush1.msra.mxu0 %v357
        %484 = vmatprep.subr.mxu0 0.0
        %485 = vmatpush1.msra.mxu0 %v356
        %486 = vmatprep.subr.mxu0 0.0
        %487 = vmatpush1.msra.mxu0 %v355
        %488 = vmatprep.subr.mxu0 0.0
        %489 = vmatpush1.msra.mxu0 %v354
        %490 = vmatprep.subr.mxu0 0.0
        %491 = vmatpush1.msra.mxu0 %v353
        %492 = vmatprep.subr.mxu0 0.0
        %493 = vmatpush2.msra.mxu0 %v384
        %494 = vmatprep.subr.mxu0 0.0
        %495 = vmatpush2.msra.mxu0 %v383
        %496 = vmatprep.subr.mxu0 0.0
        %497 = vmatpush2.msra.mxu0 %v382
        %498 = vmatprep.subr.mxu0 0.0
        %499 = vmatpush2.msra.mxu0 %v381
        %500 = vmatprep.subr.mxu0 0.0
        %501 = vmatpush2.msra.mxu0 %v380
        %502 = vmatprep.subr.mxu0 0.0
        %503 = vmatpush2.msra.mxu0 %v379
        %504 = vmatprep.subr.mxu0 0.0
        %505 = vmatpush2.msra.mxu0 %v378
        %506 = vmatprep.subr.mxu0 0.0
        %507 = vmatpush2.msra.mxu0 %v377
        %508 = vmatprep.subr.mxu0 0.0
        %509 = vmatpush2.msra.mxu0 %v376
        %510 = vmatprep.subr.mxu0 0.0
        %511 = vmatpush2.msra.mxu0 %v375
        %512 = vmatprep.subr.mxu0 0.0
        %513 = vmatpush2.msra.mxu0 %v374
        %514 = vmatprep.subr.mxu0 0.0
        %515 = vmatpush2.msra.mxu0 %v373
        %516 = vmatprep.subr.mxu0 0.0
        %517 = vmatpush2.msra.mxu0 %v372
        %518 = vmatprep.subr.mxu0 0.0
        %519 = vmatpush2.msra.mxu0 %v371
        %520 = vmatprep.subr.mxu0 0.0
        %521 = vmatpush2.msra.mxu0 %v370
        %522 = vmatprep.subr.mxu0 0.0
        %523 = vmatpush2.msra.mxu0 %v369
        %524 = vmatprep.mubr.f32.mxu0 %v314
        %525 = vmatmul.mubr.f32.gmra.mxu0 %v313
        %v526 = vpop.f32.mrf.mxu0
        %v527 = vadd.f32 %v452, %v526
        %v528 = vpop.f32.mrf.mxu0
        %529 = vmatprep.mubr.f32.mxu0 %v318
        %530 = vmatmul.mubr.f32.gmra.mxu0 %v317
        %v531 = vpop.f32.mrf.mxu0
        %v532 = vadd.f32 %v457, %v531
        %v533 = vpop.f32.mrf.mxu0
        %534 = vdwg.mxu0
        %v535 = vadd.f32 %v319, %v527
        %v536 = vadd.f32 %v320, %v532
        %537 = vst [vmem:[#allocation2] sm:$0xff] %v535
        %538 = vst [vmem:[#allocation2 + $0x8] sm:$0xff] %v536
        %p539 = scmp.eq.s32.totalorder %s23, 1
        // Predicated region
        $region72: #{wrapped_model_forward.1} parent=58 // pred_check
          %p540 = pneg %p539
        $region73: #{wrapped_model_forward.1} parent=58 // pred_check_branch
          %542 = sbr.rel (%p540) target = $region75
        $region74: #{wrapped_model_forward.1} parent=58 // pred_region
          %v543 = vld [vmem:[#allocation2] sm:$0xff]
          %v544 = vld [vmem:[#allocation2 + $0x8] sm:$0xff]
          %v545 = vld [vmem:[%s2] sm:$0x1]
          %v547 = vlaneseq
          %v548 = vshrl.u32 %v547, 7
          %v549 = vsub.s32 0, %v548
          %v550 = vrot.slane %v545, %v549
          %v552 = vadd.f32 %v543, %v550
          %v553 = vadd.f32 %v544, %v550
          %v554 = vmax.f32 %v552, 0.0
          %v555 = vmax.f32 %v553, 0.0
          %v556 = vld [vmem:[%s3] sm:$0xff]
          %v557 = vld [vmem:[%s3 + $0x8] sm:$0xff]
          %v558 = vld [vmem:[%s3 + $0x10] sm:$0xff]
          %v559 = vld [vmem:[%s3 + $0x18] sm:$0xff]
          %v560 = vld [vmem:[%s3 + $0x20] sm:$0xff]
          %v561 = vld [vmem:[%s3 + $0x28] sm:$0xff]
          %v562 = vld [vmem:[%s3 + $0x30] sm:$0xff]
          %v563 = vld [vmem:[%s3 + $0x38] sm:$0xff]
          %v564 = vld [vmem:[%s3 + $0x40] sm:$0xff]
          %v565 = vld [vmem:[%s3 + $0x48] sm:$0xff]
          %v566 = vld [vmem:[%s3 + $0x50] sm:$0xff]
          %v567 = vld [vmem:[%s3 + $0x58] sm:$0xff]
          %v568 = vld [vmem:[%s3 + $0x60] sm:$0xff]
          %v569 = vld [vmem:[%s3 + $0x68] sm:$0xff]
          %v570 = vld [vmem:[%s3 + $0x70] sm:$0xff]
          %v571 = vld [vmem:[%s3 + $0x78] sm:$0xff]
          %v572 = vld [vmem:[#allocation4] sm:$0x1]
          %v574 = vlaneseq
          %v575 = vshrl.u32 %v574, 7
          %v576 = vsub.s32 0, %v575
          %v577 = vrot.slane %v572, %v576
          %579 = vmatprep.subr.mxu0 0.0
          %580 = vmatpush1.msra.mxu0 %v571
          %581 = vmatprep.subr.mxu0 0.0
          %582 = vmatpush1.msra.mxu0 %v570
          %583 = vmatprep.subr.mxu0 0.0
          %584 = vmatpush1.msra.mxu0 %v569
          %585 = vmatprep.subr.mxu0 0.0
          %586 = vmatpush1.msra.mxu0 %v568
          %587 = vmatprep.subr.mxu0 0.0
          %588 = vmatpush1.msra.mxu0 %v567
          %589 = vmatprep.subr.mxu0 0.0
          %590 = vmatpush1.msra.mxu0 %v566
          %591 = vmatprep.subr.mxu0 0.0
          %592 = vmatpush1.msra.mxu0 %v565
          %593 = vmatprep.subr.mxu0 0.0
          %594 = vmatpush1.msra.mxu0 %v564
          %595 = vmatprep.subr.mxu0 0.0
          %596 = vmatpush1.msra.mxu0 %v563
          %597 = vmatprep.subr.mxu0 0.0
          %598 = vmatpush1.msra.mxu0 %v562
          %599 = vmatprep.subr.mxu0 0.0
          %600 = vmatpush1.msra.mxu0 %v561
          %601 = vmatprep.subr.mxu0 0.0
          %602 = vmatpush1.msra.mxu0 %v560
          %603 = vmatprep.subr.mxu0 0.0
          %604 = vmatpush1.msra.mxu0 %v559
          %605 = vmatprep.subr.mxu0 0.0
          %606 = vmatpush1.msra.mxu0 %v558
          %607 = vmatprep.subr.mxu0 0.0
          %608 = vmatpush1.msra.mxu0 %v557
          %609 = vmatprep.subr.mxu0 0.0
          %610 = vmatpush1.msra.mxu0 %v556
          %611 = vmatprep.subr.mxu0 0.0
          %612 = vmatpush2.msra.mxu0 0.0
          %613 = vmatprep.subr.mxu0 0.0
          %614 = vmatpush2.msra.mxu0 0.0
          %615 = vmatprep.subr.mxu0 0.0
          %616 = vmatpush2.msra.mxu0 0.0
          %617 = vmatprep.subr.mxu0 0.0
          %618 = vmatpush2.msra.mxu0 0.0
          %619 = vmatprep.subr.mxu0 0.0
          %620 = vmatpush2.msra.mxu0 0.0
          %621 = vmatprep.subr.mxu0 0.0
          %622 = vmatpush2.msra.mxu0 0.0
          %623 = vmatprep.subr.mxu0 0.0
          %624 = vmatpush2.msra.mxu0 0.0
          %625 = vmatprep.subr.mxu0 0.0
          %626 = vmatpush2.msra.mxu0 0.0
          %627 = vmatprep.subr.mxu0 0.0
          %628 = vmatpush2.msra.mxu0 0.0
          %629 = vmatprep.subr.mxu0 0.0
          %630 = vmatpush2.msra.mxu0 0.0
          %631 = vmatprep.subr.mxu0 0.0
          %632 = vmatpush2.msra.mxu0 0.0
          %633 = vmatprep.subr.mxu0 0.0
          %634 = vmatpush2.msra.mxu0 0.0
          %635 = vmatprep.subr.mxu0 0.0
          %636 = vmatpush2.msra.mxu0 0.0
          %637 = vmatprep.subr.mxu0 0.0
          %638 = vmatpush2.msra.mxu0 0.0
          %639 = vmatprep.subr.mxu0 0.0
          %640 = vmatpush2.msra.mxu0 0.0
          %641 = vmatprep.subr.mxu0 0.0
          %642 = vmatpush2.msra.mxu0 0.0
          %643 = vmatprep.mubr.f32.mxu0 0.0
          %644 = vmatmul.mubr.f32.gmra.mxu0 %v554
          %v645 = vpop.f32.mrf.mxu0
          %v646 = vadd.f32 %v577, %v645
          %v647 = vpop.f32.mrf.mxu0
          %648 = vmatprep.mubr.f32.mxu0 0.0
          %649 = vmatmul.mubr.f32.gmra.mxu0 %v555
          %v650 = vpop.f32.mrf.mxu0
          %v651 = vadd.f32 %v577, %v650
          %v652 = vpop.f32.mrf.mxu0
          %653 = vdwg.mxu0
          %654 = vst [vmem:[#allocation7] sm:$0xff] %v646
          %655 = vst [vmem:[#allocation7 + $0x8] sm:$0xff] %v651
        $region75: #{wrapped_model_forward.1} parent=58 // pred_fallthru
          _
        // Predicated region
        $region76: #{wrapped_model_forward.1} parent=58 // pred_check
          %p656 = pneg %p165
        $region77: #{wrapped_model_forward.1} parent=58 // pred_check_branch
          %658 = sbr.rel (%p656) target = $region79
        $region78: #{wrapped_model_forward.1} parent=58 // pred_region
          %s659 = smul.u32 2, %s22
          %s661 = ssub.s32 256, 256
          %662 = vsyncadd [#allocation6], %s661
          %s663 = smul.addr %s659, 128
          %s664 = scalar_lea.hbm %s5, %s663
          %s665 = sshll.u32 [#allocation7], 4
          %s666 = int_to_ptr.vmem [resolvable:$true] %s665
          %671 = dma.vmem_to_hbm [thread:$0]  %s666, 256, %s664, [#allocation6], 128, 128, 8
        $region79: #{wrapped_model_forward.1} parent=58 // pred_fallthru
          _
        // Predicated region
        $region80: #{wrapped_model_forward.1} parent=58 // pred_check
          %p672 = pneg %p165
        $region81: #{wrapped_model_forward.1} parent=58 // pred_check_branch
          %674 = sbr.rel (%p672) target = $region83
        $region82: #{wrapped_model_forward.1} parent=58 // pred_region
          %675 = dma.done [#allocation6], 256
        $region83: #{wrapped_model_forward.1} parent=58 // pred_fallthru
          _
      $region59: #{wrapped_model_forward.1} parent=5 // pred_fallthru
        _
      %p676 = scmp.le.s32.totalorder 2, %s13
      // Predicated region
      $region84: #{wrapped_model_forward.1} parent=5 // pred_check
        %p677 = pneg %p676
      $region85: #{wrapped_model_forward.1} parent=5 // pred_check_branch
        %679 = sbr.rel (%p677) target = $region87
      $region86: #{wrapped_model_forward.1} parent=5 // pred_region
        %s680 = ssub.s32 %s13, 2
      $region87: #{wrapped_model_forward.1} parent=5 // pred_fallthru
        _
    $region6: #{wrapped_model_forward.1} parent=1 // loop_footer
      %s17 = sadd.s32 1, %s13
    $region7: #{wrapped_model_forward.1} parent=1 // loop_footer_branch
      %12 = sbr.rel target = $region3
    $region8: #{wrapped_model_forward.1} parent=1 // loop_exit
      _
    %681 = vsyncpa [#allocation5], 1
    %s682 = scalar_lea.sflag [#allocation5], 1
    %683 = vsyncpa %s682, 1
    %684 = vsyncpa [#allocation6], 1
    %s685 = scalar_lea.sflag [#allocation6], 1
    %686 = vsyncpa %s685, 1

</llo_original>
